<compile_context>
chip_gen: v6e
topology: v6e:2x2x1
jax: 0.10.0
libtpu: 0.0.40
codegen_flags: <defaults>
</compile_context>

<pallas_src>
import jax
import jax.numpy as jnp
from jax.experimental import pallas as pl
from jax.experimental.pallas import tpu as pltpu

HH = 0.1       # residual step size (the module's self.hh) -- folded into weights
LANES = 128    # TPU lane width


def _round_up(a, m):
    return ((a + m - 1) // m) * m


def _cdiv(a, b):
    return -(-a // b)


# ----------------------------------------------------------------------------
# Kernel
# ----------------------------------------------------------------------------
def vnet_kernel(tx_ref, t_ref,
                w1_ref, b1_ref,
                w2_ref, b2_ref,
                w3_ref, b3_ref,
                wl_ref, bl_ref, sx_ref,
                o_ref):
    tx = tx_ref[...]                       # (TILE_R, P*(dim+1)) f32, packed [t, x]
    tp = t_ref[...]                        # (TILE_R, P)          f32, packed t

    # lin1 on the packed [t, x] rows via the block-diagonal W1 (bf16 MXU, f32 acc)
    h = jnp.tanh(jnp.dot(tx.astype(jnp.bfloat16), w1_ref[...],
                         preferred_element_type=jnp.float32) + b1_ref[...])

    # out = act(out + hh * lin2(out))   -- hh already folded into w2/b2
    h = jnp.tanh(h + jnp.dot(h.astype(jnp.bfloat16), w2_ref[...],
                             preferred_element_type=jnp.float32) + b2_ref[...])
    # out = act(out + hh * lin3(out))   -- hh already folded into w3/b3
    h = jnp.tanh(h + jnp.dot(h.astype(jnp.bfloat16), w3_ref[...],
                             preferred_element_type=jnp.float32) + b3_ref[...])

    # linlast: per-sub-row scalar via block-diagonal (P*ns, P) projection (bf16 MXU).
    v = jnp.dot(h.astype(jnp.bfloat16), wl_ref[...],
                preferred_element_type=jnp.float32) + bl_ref[...]

    # psi = 0.5 * ||x||^2 per original row: square the packed [t,x] rows and
    # reduce each block's x-lanes with a 0/1 selection matmul (f32 for exactness).
    psi = 0.5 * jnp.dot(tx * tx, sx_ref[...], preferred_element_type=jnp.float32)

    # time interpolation with the terminal condition: (1-t)*v + t*psi
    o_ref[...] = v + tp * (psi - v)


# ----------------------------------------------------------------------------
# Glue code
# ----------------------------------------------------------------------------
def init_params(key, dim, ns):
    """Deterministic synthetic parameters; Linear weights stored as (in, out)."""
    ks = jax.random.split(key, 8)
    s = 0.1
    return dict(
        w1=s * jax.random.normal(ks[0], (dim + 1, ns), jnp.float32),
        b1=s * jax.random.normal(ks[1], (1, ns), jnp.float32),
        w2=s * jax.random.normal(ks[2], (ns, ns), jnp.float32),
        b2=s * jax.random.normal(ks[3], (1, ns), jnp.float32),
        w3=s * jax.random.normal(ks[4], (ns, ns), jnp.float32),
        b3=s * jax.random.normal(ks[5], (1, ns), jnp.float32),
        wl=s * jax.random.normal(ks[6], (ns, 1), jnp.float32),
        bl=s * jax.random.normal(ks[7], (1, 1), jnp.float32),
    )


def pack_params(params, dim):
    """Lane-packed (block-diagonal) weights so P batch rows share a vreg.

    The residual step size HH is folded into w2/b2 and w3/b3 here (one-time
    static change), so the kernel never multiplies by HH.
    """
    ns = params["w2"].shape[0]
    p = max(1, LANES // ns)                       # pack factor (4 for ns=32)
    eye = jnp.eye(p, dtype=jnp.float32)
    w1_bd = jnp.kron(eye, params["w1"]).astype(jnp.bfloat16)         # (P*(dim+1), P*ns)
    w2_bd = jnp.kron(eye, HH * params["w2"]).astype(jnp.bfloat16)    # (P*ns, P*ns)
    w3_bd = jnp.kron(eye, HH * params["w3"]).astype(jnp.bfloat16)
    wl_bd = jnp.kron(eye, params["wl"]).astype(jnp.bfloat16)         # (P*ns, P)
    # selector that sums the x-lanes (not the t-lane) of each packed block
    sel = jnp.concatenate([jnp.zeros((1, 1), jnp.float32),
                           jnp.ones((dim, 1), jnp.float32)], axis=0)
    sx = jnp.kron(eye, sel)                                          # (P*(dim+1), P)
    return dict(
        pack=p, dim=dim, ns=ns,
        w1_bd=w1_bd, b1=jnp.tile(params["b1"], (1, p)),
        w2_bd=w2_bd, b2=jnp.tile(HH * params["b2"], (1, p)),
        w3_bd=w3_bd, b3=jnp.tile(HH * params["b3"], (1, p)),
        wl_bd=wl_bd, bl=jnp.tile(params["bl"].astype(jnp.float32), (1, p)),
        sx=sx,
    )


def _choose_tile_r(r_needed, tile_b, pack):
    """Packed-row tile size: big enough to amortize per-step overhead, clamped
    to what's needed, and capped so big batches always get >= 2 grid steps
    (v7x megacore; also keeps per-TC VMEM use bounded on its 64 MiB budget)."""
    align = 16                                     # bf16 sublane-pair aligned
    want = _round_up(max(align, tile_b // pack), align)
    cap = _round_up(r_needed, align)               # don't compute mostly padding
    tile_r = min(want, cap)
    half = _round_up(_cdiv(r_needed, 2), align)
    if cap >= 2 * align and tile_r > half:
        tile_r = half                               # guarantees >= 2 grid steps
    return tile_r


def vnet_forward(t, x, packed, *, tile_b=8192):
    """t: (B,1) f32, x: (B,dim) f32 -> (B,1) f32."""
    B, dim = x.shape
    P = packed["pack"]
    ns = packed["ns"]
    c = dim + 1

    # --- choose packed-row tile size and pad the batch -----------------------
    r_needed = _cdiv(B, P)
    tile_r = _choose_tile_r(r_needed, tile_b, P)
    r_total = _round_up(r_needed, tile_r)
    b_pad = r_total * P
    pad = b_pad - B

    tx = jnp.concatenate([t.astype(jnp.float32), x.astype(jnp.float32)], axis=1)
    tx = jnp.pad(tx, ((0, pad), (0, 0)))
    t_full = jnp.pad(t.astype(jnp.float32), ((0, pad), (0, 0)))

    tx_packed = tx.reshape(r_total, P * c)         # contiguous -> free reshape
    t_packed = t_full.reshape(r_total, P)

    # --- specs ---------------------------------------------------------------
    def tiled(last):
        return pl.BlockSpec((tile_r, last), lambda i: (i, 0))

    def resident(a):
        return pl.BlockSpec(a.shape, lambda i: (0, 0))   # VMEM-resident weights

    args = (tx_packed, t_packed,
            packed["w1_bd"], packed["b1"],
            packed["w2_bd"], packed["b2"],
            packed["w3_bd"], packed["b3"],
            packed["wl_bd"], packed["bl"], packed["sx"])
    in_specs = [tiled(P * c), tiled(P)] + [resident(a) for a in args[2:]]

    weight_bytes = sum(int(a.size) * a.dtype.itemsize for a in args[2:])
    flops_per_row = 2 * (c * ns + 2 * ns * ns + ns) + 2 * c
    cost = pl.CostEstimate(
        flops=int(b_pad * flops_per_row),
        transcendentals=int(3 * b_pad * ns),
        bytes_accessed=int(tx_packed.size * 4 + t_packed.size * 4
                           + b_pad * 4 + weight_bytes),
    )

    out = pl.pallas_call(
        vnet_kernel,
        out_shape=jax.ShapeDtypeStruct((r_total, P), jnp.float32),
        grid=(r_total // tile_r,),
        in_specs=in_specs,
        out_specs=pl.BlockSpec((tile_r, P), lambda i: (i, 0)),
        compiler_params=pltpu.CompilerParams(
            dimension_semantics=("parallel",),
            vmem_limit_bytes=48 * 1024 * 1024),   # explicit; < v7x 64 MiB physical
        cost_estimate=cost,
    )(*args)

    return out.reshape(b_pad, 1)[:B]


def vnet_reference(t, x, p):
    """Pure-JAX f32 reference matching the PyTorch forward semantics."""
    cat = jnp.concatenate([t, x], axis=1)
    h = jnp.tanh(cat @ p["w1"] + p["b1"])
    h = jnp.tanh(h + HH * (h @ p["w2"] + p["b2"]))
    h = jnp.tanh(h + HH * (h @ p["w3"] + p["b3"]))
    out = h @ p["wl"] + p["bl"]
    psi = 0.5 * jnp.sum(x * x, axis=1, keepdims=True)
    return (1.0 - t) * out + t * psi


# TODO(synk): the module's get_grad (autograd ∇_x V) is not reimplemented
# in-kernel; use jax.grad around vnet_reference / a differentiable wrapper.

if __name__ == "__main__":
    dim, ns = 4, 32
    key = jax.random.PRNGKey(0)
    k_t, k_x, k_p, k_t2, k_x2 = jax.random.split(key, 5)

    params = init_params(k_p, dim, ns)
    packed = pack_params(params, dim)

    # Check 1: small batch, single grid step, default (large) tile clamped down.
    B1 = 8
    t1 = jax.random.uniform(k_t, (B1, 1), jnp.float32)
    x1 = jax.random.normal(k_x, (B1, dim), jnp.float32)
    out1 = jax.block_until_ready(vnet_forward(t1, x1, packed))
    ref1 = vnet_reference(t1, x1, params)
    assert out1.shape == (B1, 1)
    assert jnp.allclose(out1, ref1, atol=2e-2, rtol=2e-2), "mismatch (test 1)"

    # Check 2: batch not a multiple of the tile -> exercises padding + a
    # multi-step grid with VMEM-resident weights (and the >=2-step cap).
    B2 = 100
    t2 = jax.random.uniform(k_t2, (B2, 1), jnp.float32)
    x2 = jax.random.normal(k_x2, (B2, dim), jnp.float32)
    out2 = jax.block_until_ready(vnet_forward(t2, x2, packed, tile_b=64))
    ref2 = vnet_reference(t2, x2, params)
    assert out2.shape == (B2, 1)
    assert jnp.allclose(out2, ref2, atol=2e-2, rtol=2e-2), "mismatch (test 2)"

    print("KERNEL_OK")
</pallas_src>

<mosaic_0001>
module attributes {stable_mosaic.version = 11 : i64} {
  func.func @vnet_kernel(%arg0: i32, %arg1: memref<16x20xf32, #tpu.memory_space<vmem>>, %arg2: memref<16x4xf32, #tpu.memory_space<vmem>>, %arg3: memref<20x128xbf16, #tpu.memory_space<vmem>>, %arg4: memref<1x128xf32, #tpu.memory_space<vmem>>, %arg5: memref<128x128xbf16, #tpu.memory_space<vmem>>, %arg6: memref<1x128xf32, #tpu.memory_space<vmem>>, %arg7: memref<128x128xbf16, #tpu.memory_space<vmem>>, %arg8: memref<1x128xf32, #tpu.memory_space<vmem>>, %arg9: memref<128x4xbf16, #tpu.memory_space<vmem>>, %arg10: memref<1x4xf32, #tpu.memory_space<vmem>>, %arg11: memref<20x4xf32, #tpu.memory_space<vmem>>, %arg12: memref<16x4xf32, #tpu.memory_space<vmem>>) attributes {dimension_semantics = [#tpu.dimension_semantics<parallel>], iteration_bounds = array<i64: 1>, scalar_prefetch = 0 : i64, scratch_operands = 0 : i64, tpu.core_type = #tpu.core_type<tc>, window_params = [{transform_indices = @transform_0, window_bounds = array<i64: 16, 20>}, {transform_indices = @transform_1, window_bounds = array<i64: 16, 4>}, {pipeline_mode = #tpu.pipeline_mode<synchronous>, transform_indices = @transform_2, window_bounds = array<i64: 20, 128>}, {pipeline_mode = #tpu.pipeline_mode<synchronous>, transform_indices = @transform_3, window_bounds = array<i64: 1, 128>}, {pipeline_mode = #tpu.pipeline_mode<synchronous>, transform_indices = @transform_4, window_bounds = array<i64: 128, 128>}, {pipeline_mode = #tpu.pipeline_mode<synchronous>, transform_indices = @transform_5, window_bounds = array<i64: 1, 128>}, {pipeline_mode = #tpu.pipeline_mode<synchronous>, transform_indices = @transform_6, window_bounds = array<i64: 128, 128>}, {pipeline_mode = #tpu.pipeline_mode<synchronous>, transform_indices = @transform_7, window_bounds = array<i64: 1, 128>}, {pipeline_mode = #tpu.pipeline_mode<synchronous>, transform_indices = @transform_8, window_bounds = array<i64: 128, 4>}, {pipeline_mode = #tpu.pipeline_mode<synchronous>, transform_indices = @transform_9, window_bounds = array<i64: 1, 4>}, {pipeline_mode = #tpu.pipeline_mode<synchronous>, transform_indices = @transform_10, window_bounds = array<i64: 20, 4>}, {transform_indices = @transform_11, window_bounds = array<i64: 16, 4>}]} {
    %c0 = arith.constant 0 : index
    %c0_0 = arith.constant 0 : index
    %0 = vector.load %arg1[%c0, %c0_0] : memref<16x20xf32, #tpu.memory_space<vmem>>, vector<16x20xf32>
    %c0_1 = arith.constant 0 : index
    %c0_2 = arith.constant 0 : index
    %1 = vector.load %arg2[%c0_1, %c0_2] : memref<16x4xf32, #tpu.memory_space<vmem>>, vector<16x4xf32>
    %2 = arith.truncf %0 : vector<16x20xf32> to vector<16x20xbf16>
    %c0_3 = arith.constant 0 : index
    %c0_4 = arith.constant 0 : index
    %3 = vector.load %arg3[%c0_3, %c0_4] : memref<20x128xbf16, #tpu.memory_space<vmem>>, vector<20x128xbf16>
    %cst = arith.constant dense<0.000000e+00> : vector<16x128xf32>
    %4 = tpu.matmul %2, %3, %cst {dimension_numbers = #tpu.dot_dimension_numbers<[1], [0], [0], [1], [0, 0, 1, 1], [], []>} : vector<16x20xbf16>, vector<20x128xbf16>, vector<16x128xf32> -> vector<16x128xf32>
    %c0_5 = arith.constant 0 : index
    %c0_6 = arith.constant 0 : index
    %5 = vector.load %arg4[%c0_5, %c0_6] : memref<1x128xf32, #tpu.memory_space<vmem>>, vector<1x128xf32>
    %6 = vector.broadcast %5 : vector<1x128xf32> to vector<16x128xf32>
    %7 = arith.addf %4, %6 : vector<16x128xf32>
    %8 = math.tanh %7 : vector<16x128xf32>
    %9 = arith.truncf %8 : vector<16x128xf32> to vector<16x128xbf16>
    %c0_7 = arith.constant 0 : index
    %c0_8 = arith.constant 0 : index
    %10 = vector.load %arg5[%c0_7, %c0_8] : memref<128x128xbf16, #tpu.memory_space<vmem>>, vector<128x128xbf16>
    %cst_9 = arith.constant dense<0.000000e+00> : vector<16x128xf32>
    %11 = tpu.matmul %9, %10, %cst_9 {dimension_numbers = #tpu.dot_dimension_numbers<[1], [0], [0], [1], [0, 0, 1, 1], [], []>} : vector<16x128xbf16>, vector<128x128xbf16>, vector<16x128xf32> -> vector<16x128xf32>
    %12 = arith.addf %8, %11 : vector<16x128xf32>
    %c0_10 = arith.constant 0 : index
    %c0_11 = arith.constant 0 : index
    %13 = vector.load %arg6[%c0_10, %c0_11] : memref<1x128xf32, #tpu.memory_space<vmem>>, vector<1x128xf32>
    %14 = vector.broadcast %13 : vector<1x128xf32> to vector<16x128xf32>
    %15 = arith.addf %12, %14 : vector<16x128xf32>
    %16 = math.tanh %15 : vector<16x128xf32>
    %17 = arith.truncf %16 : vector<16x128xf32> to vector<16x128xbf16>
    %c0_12 = arith.constant 0 : index
    %c0_13 = arith.constant 0 : index
    %18 = vector.load %arg7[%c0_12, %c0_13] : memref<128x128xbf16, #tpu.memory_space<vmem>>, vector<128x128xbf16>
    %cst_14 = arith.constant dense<0.000000e+00> : vector<16x128xf32>
    %19 = tpu.matmul %17, %18, %cst_14 {dimension_numbers = #tpu.dot_dimension_numbers<[1], [0], [0], [1], [0, 0, 1, 1], [], []>} : vector<16x128xbf16>, vector<128x128xbf16>, vector<16x128xf32> -> vector<16x128xf32>
    %20 = arith.addf %16, %19 : vector<16x128xf32>
    %c0_15 = arith.constant 0 : index
    %c0_16 = arith.constant 0 : index
    %21 = vector.load %arg8[%c0_15, %c0_16] : memref<1x128xf32, #tpu.memory_space<vmem>>, vector<1x128xf32>
    %22 = vector.broadcast %21 : vector<1x128xf32> to vector<16x128xf32>
    %23 = arith.addf %20, %22 : vector<16x128xf32>
    %24 = math.tanh %23 : vector<16x128xf32>
    %25 = arith.truncf %24 : vector<16x128xf32> to vector<16x128xbf16>
    %c0_17 = arith.constant 0 : index
    %c0_18 = arith.constant 0 : index
    %26 = vector.load %arg9[%c0_17, %c0_18] : memref<128x4xbf16, #tpu.memory_space<vmem>>, vector<128x4xbf16>
    %cst_19 = arith.constant dense<0.000000e+00> : vector<16x4xf32>
    %27 = tpu.matmul %25, %26, %cst_19 {dimension_numbers = #tpu.dot_dimension_numbers<[1], [0], [0], [1], [0, 0, 1, 1], [], []>} : vector<16x128xbf16>, vector<128x4xbf16>, vector<16x4xf32> -> vector<16x4xf32>
    %c0_20 = arith.constant 0 : index
    %c0_21 = arith.constant 0 : index
    %28 = vector.load %arg10[%c0_20, %c0_21] : memref<1x4xf32, #tpu.memory_space<vmem>>, vector<1x4xf32>
    %29 = vector.broadcast %28 : vector<1x4xf32> to vector<16x4xf32>
    %30 = arith.addf %27, %29 : vector<16x4xf32>
    %31 = arith.mulf %0, %0 : vector<16x20xf32>
    %c0_22 = arith.constant 0 : index
    %c0_23 = arith.constant 0 : index
    %32 = vector.load %arg11[%c0_22, %c0_23] : memref<20x4xf32, #tpu.memory_space<vmem>>, vector<20x4xf32>
    %cst_24 = arith.constant dense<0.000000e+00> : vector<16x4xf32>
    %33 = tpu.matmul %31, %32, %cst_24 {dimension_numbers = #tpu.dot_dimension_numbers<[1], [0], [0], [1], [0, 0, 1, 1], [], []>} : vector<16x20xf32>, vector<20x4xf32>, vector<16x4xf32> -> vector<16x4xf32>
    %cst_25 = arith.constant 5.000000e-01 : f32
    %34 = vector.broadcast %cst_25 : f32 to vector<16x4xf32>
    %35 = arith.mulf %34, %33 : vector<16x4xf32>
    %36 = arith.subf %35, %30 : vector<16x4xf32>
    %37 = arith.mulf %1, %36 : vector<16x4xf32>
    %38 = arith.addf %30, %37 : vector<16x4xf32>
    %c0_26 = arith.constant 0 : index
    %c0_27 = arith.constant 0 : index
    %39 = vector.load %arg12[%c0_26, %c0_27] : memref<16x4xf32, #tpu.memory_space<vmem>>, vector<16x4xf32>
    tpu.vector_store %arg12[%c0_26, %c0_27], %38 {strides = array<i32>} : memref<16x4xf32, #tpu.memory_space<vmem>>, vector<16x4xf32>,
    return
  }
  func.func @transform_0(%arg0: i32) -> (i32, i32) {
    %c0_i32 = arith.constant 0 : i32
    %c0_i32_0 = arith.constant 0 : i32
    return %arg0, %c0_i32 : i32, i32
  }
  func.func @transform_1(%arg0: i32) -> (i32, i32) {
    %c0_i32 = arith.constant 0 : i32
    %c0_i32_0 = arith.constant 0 : i32
    return %arg0, %c0_i32 : i32, i32
  }
  func.func @transform_2(%arg0: i32) -> (i32, i32) {
    %c0_i32 = arith.constant 0 : i32
    %c0_i32_0 = arith.constant 0 : i32
    %c0_i32_1 = arith.constant 0 : i32
    return %c0_i32, %c0_i32_0 : i32, i32
  }
  func.func @transform_3(%arg0: i32) -> (i32, i32) {
    %c0_i32 = arith.constant 0 : i32
    %c0_i32_0 = arith.constant 0 : i32
    %c0_i32_1 = arith.constant 0 : i32
    return %c0_i32, %c0_i32_0 : i32, i32
  }
  func.func @transform_4(%arg0: i32) -> (i32, i32) {
    %c0_i32 = arith.constant 0 : i32
    %c0_i32_0 = arith.constant 0 : i32
    %c0_i32_1 = arith.constant 0 : i32
    return %c0_i32, %c0_i32_0 : i32, i32
  }
  func.func @transform_5(%arg0: i32) -> (i32, i32) {
    %c0_i32 = arith.constant 0 : i32
    %c0_i32_0 = arith.constant 0 : i32
    %c0_i32_1 = arith.constant 0 : i32
    return %c0_i32, %c0_i32_0 : i32, i32
  }
  func.func @transform_6(%arg0: i32) -> (i32, i32) {
    %c0_i32 = arith.constant 0 : i32
    %c0_i32_0 = arith.constant 0 : i32
    %c0_i32_1 = arith.constant 0 : i32
    return %c0_i32, %c0_i32_0 : i32, i32
  }
  func.func @transform_7(%arg0: i32) -> (i32, i32) {
    %c0_i32 = arith.constant 0 : i32
    %c0_i32_0 = arith.constant 0 : i32
    %c0_i32_1 = arith.constant 0 : i32
    return %c0_i32, %c0_i32_0 : i32, i32
  }
  func.func @transform_8(%arg0: i32) -> (i32, i32) {
    %c0_i32 = arith.constant 0 : i32
    %c0_i32_0 = arith.constant 0 : i32
    %c0_i32_1 = arith.constant 0 : i32
    return %c0_i32, %c0_i32_0 : i32, i32
  }
  func.func @transform_9(%arg0: i32) -> (i32, i32) {
    %c0_i32 = arith.constant 0 : i32
    %c0_i32_0 = arith.constant 0 : i32
    %c0_i32_1 = arith.constant 0 : i32
    return %c0_i32, %c0_i32_0 : i32, i32
  }
  func.func @transform_10(%arg0: i32) -> (i32, i32) {
    %c0_i32 = arith.constant 0 : i32
    %c0_i32_0 = arith.constant 0 : i32
    %c0_i32_1 = arith.constant 0 : i32
    return %c0_i32, %c0_i32_0 : i32, i32
  }
  func.func @transform_11(%arg0: i32) -> (i32, i32) {
    %c0_i32 = arith.constant 0 : i32
    %c0_i32_0 = arith.constant 0 : i32
    return %arg0, %c0_i32 : i32, i32
  }
}

</mosaic_0001>

<llo_original>
// kernel: tpu_custom_call.1
$region0: #{tpu_custom_call.1}
  #allocation0 [shape = 'u32[]', space=smem, size = 0x4, offset = 0x4, fixed_abs, tag = 'smem constant byte address 0x4 - core index']
  #allocation1 [shape = 'u32[144,128]{1,0:T(1,128)}', space=vmem, size = 0x12000, scoped, tag = 'internal scratch']
  %s0 = inlined_call_operand.vmem [shape: f32[16,20], index: 0, kind: input, shape index: {}]
  %s1 = inlined_call_operand.vmem [shape: f32[16,4], index: 1, kind: input, shape index: {}]
  %s2 = inlined_call_operand.vmem [shape: bf16[20,128], index: 2, kind: input, shape index: {}]
  %s3 = inlined_call_operand.vmem [shape: f32[1,128], index: 3, kind: input, shape index: {}]
  %s4 = inlined_call_operand.vmem [shape: bf16[128,128], index: 4, kind: input, shape index: {}]
  %s5 = inlined_call_operand.vmem [shape: f32[1,128], index: 5, kind: input, shape index: {}]
  %s6 = inlined_call_operand.hbm [shape: bf16[128,128], index: 6, kind: input, shape index: {}]
  %s7 = inlined_call_operand.vmem [shape: f32[1,128], index: 7, kind: input, shape index: {}]
  %s8 = inlined_call_operand.vmem [shape: bf16[128,4], index: 8, kind: input, shape index: {}]
  %s9 = inlined_call_operand.vmem [shape: f32[1,4], index: 9, kind: input, shape index: {}]
  %s10 = inlined_call_operand.vmem [shape: f32[20,4], index: 10, kind: input, shape index: {}]
  %s11 = inlined_call_operand.vmem [shape: f32[16,4], index: 11, kind: output, shape index: {}]
  %s12 = sld [smem:[#allocation0]]
  $region58: #{tpu_custom_call.1} parent=0
    _
  %s14 = ssub.s32 1, %s12
  %s15 = scalar_select 0, %s14, %s12
  $region1: #{tpu_custom_call.1} parent=0
    #allocation2 [shape = 'u8[32768]{0}', space=vmem, size = 0x8000, scoped, tag = 'input window, operand 6, single buffered']
    #allocation3 [shape = 's32[1]{0}', space=sflag, size = 0x4, scoped, tag = 'scoped memory for tpu_custom_call.1']
    %16 = vsyncpa [#allocation3], 0
    // Predicated region
    $region2: #{tpu_custom_call.1} parent=1 // pred_check
      _
    $region3: #{tpu_custom_call.1} parent=1 // pred_check_branch
      %18 = sbr.rel (0) target = $region5
    $region4: #{tpu_custom_call.1} parent=1 // pred_region
      _
    $region5: #{tpu_custom_call.1} parent=1 // pred_fallthru
      _
    // Predicated region
    $region6: #{tpu_custom_call.1} parent=1 // pred_check
      _
    $region7: #{tpu_custom_call.1} parent=1 // pred_check_branch
      %20 = sbr.rel (0) target = $region9
    $region8: #{tpu_custom_call.1} parent=1 // pred_region
      _
    $region9: #{tpu_custom_call.1} parent=1 // pred_fallthru
      _
    // Predicated region
    $region10: #{tpu_custom_call.1} parent=1 // pred_check
      _
    $region11: #{tpu_custom_call.1} parent=1 // pred_check_branch
      %22 = sbr.rel (0) target = $region13
    $region12: #{tpu_custom_call.1} parent=1 // pred_region
      _
    $region13: #{tpu_custom_call.1} parent=1 // pred_fallthru
      _
    // Predicated region
    $region14: #{tpu_custom_call.1} parent=1 // pred_check
      _
    $region15: #{tpu_custom_call.1} parent=1 // pred_check_branch
      %24 = sbr.rel (0) target = $region17
    $region16: #{tpu_custom_call.1} parent=1 // pred_region
      _
    $region17: #{tpu_custom_call.1} parent=1 // pred_fallthru
      _
    // Predicated region
    $region18: #{tpu_custom_call.1} parent=1 // pred_check
      _
    $region19: #{tpu_custom_call.1} parent=1 // pred_check_branch
      %26 = sbr.rel (0) target = $region21
    $region20: #{tpu_custom_call.1} parent=1 // pred_region
      _
    $region21: #{tpu_custom_call.1} parent=1 // pred_fallthru
      _
    // Predicated region
    $region22: #{tpu_custom_call.1} parent=1 // pred_check
      _
    $region23: #{tpu_custom_call.1} parent=1 // pred_check_branch
      %28 = sbr.rel (0) target = $region25
    $region24: #{tpu_custom_call.1} parent=1 // pred_region
      _
    $region25: #{tpu_custom_call.1} parent=1 // pred_fallthru
      _
    // Predicated region
    $region26: #{tpu_custom_call.1} parent=1 // pred_check
      _
    $region27: #{tpu_custom_call.1} parent=1 // pred_check_branch
      %30 = sbr.rel (0) target = $region29
    $region28: #{tpu_custom_call.1} parent=1 // pred_region
      %s32 = ssub.s32 1024, 1024
      %33 = vsyncadd [#allocation3], %s32
      %s34 = sshll.u32 [#allocation2], 4
      %s35 = int_to_ptr.vmem [resolvable:$true] %s34
      %40 = dma.hbm_to_vmem [thread:$0]  %s6, 1024, %s35, [#allocation3], 64, 64, 4
    $region29: #{tpu_custom_call.1} parent=1 // pred_fallthru
      _
    // Predicated region
    $region30: #{tpu_custom_call.1} parent=1 // pred_check
      _
    $region31: #{tpu_custom_call.1} parent=1 // pred_check_branch
      %42 = sbr.rel (0) target = $region33
    $region32: #{tpu_custom_call.1} parent=1 // pred_region
      _
    $region33: #{tpu_custom_call.1} parent=1 // pred_fallthru
      _
    // Predicated region
    $region34: #{tpu_custom_call.1} parent=1 // pred_check
      _
    $region35: #{tpu_custom_call.1} parent=1 // pred_check_branch
      %44 = sbr.rel (0) target = $region37
    $region36: #{tpu_custom_call.1} parent=1 // pred_region
      _
    $region37: #{tpu_custom_call.1} parent=1 // pred_fallthru
      _
    // Predicated region
    $region38: #{tpu_custom_call.1} parent=1 // pred_check
      _
    $region39: #{tpu_custom_call.1} parent=1 // pred_check_branch
      %46 = sbr.rel (0) target = $region41
    $region40: #{tpu_custom_call.1} parent=1 // pred_region
      _
    $region41: #{tpu_custom_call.1} parent=1 // pred_fallthru
      _
    // Predicated region
    $region42: #{tpu_custom_call.1} parent=1 // pred_check
      _
    $region43: #{tpu_custom_call.1} parent=1 // pred_check_branch
      %48 = sbr.rel (0) target = $region45
    $region44: #{tpu_custom_call.1} parent=1 // pred_region
      _
    $region45: #{tpu_custom_call.1} parent=1 // pred_fallthru
      _
    // Predicated region
    $region46: #{tpu_custom_call.1} parent=1 // pred_check
      _
    $region47: #{tpu_custom_call.1} parent=1 // pred_check_branch
      %50 = sbr.rel (0) target = $region49
    $region48: #{tpu_custom_call.1} parent=1 // pred_region
      %51 = dma.done [#allocation3], 1024
    $region49: #{tpu_custom_call.1} parent=1 // pred_fallthru
      _
    %v53 = vld [vmem:[%s0] sm:$0xff]
    %v54 = vld [vmem:[%s0 + $0x8] sm:$0xff]
    %v55 = vld [vmem:[%s1] sm:$0xff]
    %v56 = vld [vmem:[%s1 + $0x8] sm:$0xff]
    %v57 = vpack.c.bf16 %v54, %v53
    %v58 = vld [vmem:[%s2] sm:$0xf]
    %v59 = vld [vmem:[%s2 + $0x4] sm:$0xf]
    %v60 = vld [vmem:[%s2 + $0x8] sm:$0x3]
    %v61 = vld [vmem:[%s3] sm:$0x1]
    %v63 = vlaneseq
    %v64 = vshrl.u32 %v63, 7
    %v65 = vsub.s32 0, %v64
    %v66 = vrot.slane %v61, %v65
    %v71 = vunpack.c.l.b16 %v58
    %v72 = vunpack.c.l.b16 %v59
    %v73 = vunpack.c.l.b16 %v60
    %v74 = vpack.c.b16 %v72, %v71
    %v75 = vpack.c.b16 %v73, %v73
    %vm77 = vcmask 162816
    %v79 = vsel %vm77, %v57, 0
    %vm81 = vcmask 1041408
    %v83 = vsel %vm81, %v75, 0
    %85 = vmatprep.subr.bf16.mxu0 0
    %86 = vmatpush1.bf16.msra.mxu0 0
    %87 = vmatprep.subr.bf16.mxu0 0
    %88 = vmatpush1.bf16.msra.mxu0 0
    %89 = vmatprep.subr.bf16.mxu0 0
    %90 = vmatpush1.bf16.msra.mxu0 0
    %91 = vmatprep.subr.bf16.mxu0 0
    %92 = vmatpush1.bf16.msra.mxu0 0
    %93 = vmatprep.subr.bf16.mxu0 0
    %94 = vmatpush1.bf16.msra.mxu0 0
    %95 = vmatprep.subr.bf16.mxu0 0
    %96 = vmatpush1.bf16.msra.mxu0 0
    %97 = vmatprep.subr.bf16.mxu0 0
    %98 = vmatpush1.bf16.msra.mxu0 %v83
    %99 = vmatprep.subr.bf16.mxu0 0
    %100 = vmatpush1.bf16.msra.mxu0 %v74
    %101 = vmatprep.subr.bf16.mxu0 0
    %102 = vmatpush2.bf16.msra.mxu0 0
    %103 = vmatprep.subr.bf16.mxu0 0
    %104 = vmatpush2.bf16.msra.mxu0 0
    %105 = vmatprep.subr.bf16.mxu0 0
    %106 = vmatpush2.bf16.msra.mxu0 0
    %107 = vmatprep.subr.bf16.mxu0 0
    %108 = vmatpush2.bf16.msra.mxu0 0
    %109 = vmatprep.subr.bf16.mxu0 0
    %110 = vmatpush2.bf16.msra.mxu0 0
    %111 = vmatprep.subr.bf16.mxu0 0
    %112 = vmatpush2.bf16.msra.mxu0 0
    %113 = vmatprep.subr.bf16.mxu0 0
    %114 = vmatpush2.bf16.msra.mxu0 0
    %115 = vmatprep.subr.bf16.mxu0 0
    %116 = vmatpush2.bf16.msra.mxu0 0
    %117 = vmatprep.mubr.bf16.mxu0 0
    %118 = vmatmul.mubr.bf16.gmra.mxu0 %v79
    %v119 = vpop.f32.mrf.mxu0
    %v120 = vadd.f32 %v66, %v119
    %v121 = vpop.f32.mrf.mxu0
    %v122 = vpop.f32.mrf.mxu0
    %v123 = vadd.f32 %v66, %v122
    %v124 = vpop.f32.mrf.mxu0
    %125 = vdwg.mxu0
    %v126 = vtanh.pop %v120
    %v127 = vtanh.pop %v123
    %v128 = vpack.c.bf16 %v127, %v126
    %v129 = vld [vmem:[%s4] sm:$0xf]
    %v130 = vld [vmem:[%s4 + $0x4] sm:$0xf]
    %v131 = vld [vmem:[%s4 + $0x8] sm:$0xf]
    %v132 = vld [vmem:[%s4 + $0xc] sm:$0xf]
    %v133 = vld [vmem:[%s4 + $0x10] sm:$0xf]
    %v134 = vld [vmem:[%s4 + $0x14] sm:$0xf]
    %v135 = vld [vmem:[%s4 + $0x18] sm:$0xf]
    %v136 = vld [vmem:[%s4 + $0x1c] sm:$0xf]
    %v137 = vld [vmem:[%s4 + $0x20] sm:$0xf]
    %v138 = vld [vmem:[%s4 + $0x24] sm:$0xf]
    %v139 = vld [vmem:[%s4 + $0x28] sm:$0xf]
    %v140 = vld [vmem:[%s4 + $0x2c] sm:$0xf]
    %v141 = vld [vmem:[%s4 + $0x30] sm:$0xf]
    %v142 = vld [vmem:[%s4 + $0x34] sm:$0xf]
    %v143 = vld [vmem:[%s4 + $0x38] sm:$0xf]
    %v144 = vld [vmem:[%s4 + $0x3c] sm:$0xf]
    %v161 = vunpack.c.l.b16 %v129
    %v162 = vunpack.c.l.b16 %v130
    %v163 = vunpack.c.l.b16 %v131
    %v164 = vunpack.c.l.b16 %v132
    %v165 = vunpack.c.l.b16 %v133
    %v166 = vunpack.c.l.b16 %v134
    %v167 = vunpack.c.l.b16 %v135
    %v168 = vunpack.c.l.b16 %v136
    %v169 = vunpack.c.l.b16 %v137
    %v170 = vunpack.c.l.b16 %v138
    %v171 = vunpack.c.l.b16 %v139
    %v172 = vunpack.c.l.b16 %v140
    %v173 = vunpack.c.l.b16 %v141
    %v174 = vunpack.c.l.b16 %v142
    %v175 = vunpack.c.l.b16 %v143
    %v176 = vunpack.c.l.b16 %v144
    %v177 = vpack.c.b16 %v162, %v161
    %v178 = vpack.c.b16 %v164, %v163
    %v179 = vpack.c.b16 %v166, %v165
    %v180 = vpack.c.b16 %v168, %v167
    %v181 = vpack.c.b16 %v170, %v169
    %v182 = vpack.c.b16 %v172, %v171
    %v183 = vpack.c.b16 %v174, %v173
    %v184 = vpack.c.b16 %v176, %v175
    %193 = vmatprep.subr.bf16.mxu0 0
    %194 = vmatpush1.bf16.msra.mxu0 %v184
    %195 = vmatprep.subr.bf16.mxu0 0
    %196 = vmatpush1.bf16.msra.mxu0 %v183
    %197 = vmatprep.subr.bf16.mxu0 0
    %198 = vmatpush1.bf16.msra.mxu0 %v182
    %199 = vmatprep.subr.bf16.mxu0 0
    %200 = vmatpush1.bf16.msra.mxu0 %v181
    %201 = vmatprep.subr.bf16.mxu0 0
    %202 = vmatpush1.bf16.msra.mxu0 %v180
    %203 = vmatprep.subr.bf16.mxu0 0
    %204 = vmatpush1.bf16.msra.mxu0 %v179
    %205 = vmatprep.subr.bf16.mxu0 0
    %206 = vmatpush1.bf16.msra.mxu0 %v178
    %207 = vmatprep.subr.bf16.mxu0 0
    %208 = vmatpush1.bf16.msra.mxu0 %v177
    %209 = vmatprep.subr.bf16.mxu0 0
    %210 = vmatpush2.bf16.msra.mxu0 0
    %211 = vmatprep.subr.bf16.mxu0 0
    %212 = vmatpush2.bf16.msra.mxu0 0
    %213 = vmatprep.subr.bf16.mxu0 0
    %214 = vmatpush2.bf16.msra.mxu0 0
    %215 = vmatprep.subr.bf16.mxu0 0
    %216 = vmatpush2.bf16.msra.mxu0 0
    %217 = vmatprep.subr.bf16.mxu0 0
    %218 = vmatpush2.bf16.msra.mxu0 0
    %219 = vmatprep.subr.bf16.mxu0 0
    %220 = vmatpush2.bf16.msra.mxu0 0
    %221 = vmatprep.subr.bf16.mxu0 0
    %222 = vmatpush2.bf16.msra.mxu0 0
    %223 = vmatprep.subr.bf16.mxu0 0
    %224 = vmatpush2.bf16.msra.mxu0 0
    %225 = vmatprep.mubr.bf16.mxu0 0
    %226 = vmatmul.mubr.bf16.gmra.mxu0 %v128
    %v227 = vpop.f32.mrf.mxu0
    %v228 = vadd.f32 0.0, %v227
    %v229 = vpop.f32.mrf.mxu0
    %v230 = vpop.f32.mrf.mxu0
    %v231 = vadd.f32 0.0, %v230
    %v232 = vpop.f32.mrf.mxu0
    %233 = vdwg.mxu0
    %v234 = vadd.f32 %v126, %v228
    %v235 = vadd.f32 %v127, %v231
    %v236 = vld [vmem:[%s5] sm:$0x1]
    %v238 = vlaneseq
    %v239 = vshrl.u32 %v238, 7
    %v240 = vsub.s32 0, %v239
    %v241 = vrot.slane %v236, %v240
    %v243 = vadd.f32 %v234, %v241
    %v244 = vadd.f32 %v235, %v241
    %v245 = vtanh.pop %v243
    %v246 = vtanh.pop %v244
    %v247 = vpack.c.bf16 %v246, %v245
    %v248 = vld [vmem:[#allocation2] sm:$0xf]
    %v249 = vld [vmem:[#allocation2 + $0x4] sm:$0xf]
    %v250 = vld [vmem:[#allocation2 + $0x8] sm:$0xf]
    %v251 = vld [vmem:[#allocation2 + $0xc] sm:$0xf]
    %v252 = vld [vmem:[#allocation2 + $0x10] sm:$0xf]
    %v253 = vld [vmem:[#allocation2 + $0x14] sm:$0xf]
    %v254 = vld [vmem:[#allocation2 + $0x18] sm:$0xf]
    %v255 = vld [vmem:[#allocation2 + $0x1c] sm:$0xf]
    %v256 = vld [vmem:[#allocation2 + $0x20] sm:$0xf]
    %v257 = vld [vmem:[#allocation2 + $0x24] sm:$0xf]
    %v258 = vld [vmem:[#allocation2 + $0x28] sm:$0xf]
    %v259 = vld [vmem:[#allocation2 + $0x2c] sm:$0xf]
    %v260 = vld [vmem:[#allocation2 + $0x30] sm:$0xf]
    %v261 = vld [vmem:[#allocation2 + $0x34] sm:$0xf]
    %v262 = vld [vmem:[#allocation2 + $0x38] sm:$0xf]
    %v263 = vld [vmem:[#allocation2 + $0x3c] sm:$0xf]
    %v280 = vunpack.c.l.b16 %v248
    %v281 = vunpack.c.l.b16 %v249
    %v282 = vunpack.c.l.b16 %v250
    %v283 = vunpack.c.l.b16 %v251
    %v284 = vunpack.c.l.b16 %v252
    %v285 = vunpack.c.l.b16 %v253
    %v286 = vunpack.c.l.b16 %v254
    %v287 = vunpack.c.l.b16 %v255
    %v288 = vunpack.c.l.b16 %v256
    %v289 = vunpack.c.l.b16 %v257
    %v290 = vunpack.c.l.b16 %v258
    %v291 = vunpack.c.l.b16 %v259
    %v292 = vunpack.c.l.b16 %v260
    %v293 = vunpack.c.l.b16 %v261
    %v294 = vunpack.c.l.b16 %v262
    %v295 = vunpack.c.l.b16 %v263
    %v296 = vpack.c.b16 %v281, %v280
    %v297 = vpack.c.b16 %v283, %v282
    %v298 = vpack.c.b16 %v285, %v284
    %v299 = vpack.c.b16 %v287, %v286
    %v300 = vpack.c.b16 %v289, %v288
    %v301 = vpack.c.b16 %v291, %v290
    %v302 = vpack.c.b16 %v293, %v292
    %v303 = vpack.c.b16 %v295, %v294
    %312 = vmatprep.subr.bf16.mxu0 0
    %313 = vmatpush1.bf16.msra.mxu0 %v303
    %314 = vmatprep.subr.bf16.mxu0 0
    %315 = vmatpush1.bf16.msra.mxu0 %v302
    %316 = vmatprep.subr.bf16.mxu0 0
    %317 = vmatpush1.bf16.msra.mxu0 %v301
    %318 = vmatprep.subr.bf16.mxu0 0
    %319 = vmatpush1.bf16.msra.mxu0 %v300
    %320 = vmatprep.subr.bf16.mxu0 0
    %321 = vmatpush1.bf16.msra.mxu0 %v299
    %322 = vmatprep.subr.bf16.mxu0 0
    %323 = vmatpush1.bf16.msra.mxu0 %v298
    %324 = vmatprep.subr.bf16.mxu0 0
    %325 = vmatpush1.bf16.msra.mxu0 %v297
    %326 = vmatprep.subr.bf16.mxu0 0
    %327 = vmatpush1.bf16.msra.mxu0 %v296
    %328 = vmatprep.subr.bf16.mxu0 0
    %329 = vmatpush2.bf16.msra.mxu0 0
    %330 = vmatprep.subr.bf16.mxu0 0
    %331 = vmatpush2.bf16.msra.mxu0 0
    %332 = vmatprep.subr.bf16.mxu0 0
    %333 = vmatpush2.bf16.msra.mxu0 0
    %334 = vmatprep.subr.bf16.mxu0 0
    %335 = vmatpush2.bf16.msra.mxu0 0
    %336 = vmatprep.subr.bf16.mxu0 0
    %337 = vmatpush2.bf16.msra.mxu0 0
    %338 = vmatprep.subr.bf16.mxu0 0
    %339 = vmatpush2.bf16.msra.mxu0 0
    %340 = vmatprep.subr.bf16.mxu0 0
    %341 = vmatpush2.bf16.msra.mxu0 0
    %342 = vmatprep.subr.bf16.mxu0 0
    %343 = vmatpush2.bf16.msra.mxu0 0
    %344 = vmatprep.mubr.bf16.mxu0 0
    %345 = vmatmul.mubr.bf16.gmra.mxu0 %v247
    %v346 = vpop.f32.mrf.mxu0
    %v347 = vadd.f32 0.0, %v346
    %v348 = vpop.f32.mrf.mxu0
    %v349 = vpop.f32.mrf.mxu0
    %v350 = vadd.f32 0.0, %v349
    %v351 = vpop.f32.mrf.mxu0
    %352 = vdwg.mxu0
    %v353 = vadd.f32 %v245, %v347
    %v354 = vadd.f32 %v246, %v350
    %v355 = vld [vmem:[%s7] sm:$0x1]
    %v357 = vlaneseq
    %v358 = vshrl.u32 %v357, 7
    %v359 = vsub.s32 0, %v358
    %v360 = vrot.slane %v355, %v359
    %v362 = vadd.f32 %v353, %v360
    %v363 = vadd.f32 %v354, %v360
    %v364 = vtanh.pop %v362
    %v365 = vtanh.pop %v363
    %v366 = vpack.c.bf16 %v365, %v364
    %v367 = vld [vmem:[%s8] sm:$0xf]
    %v368 = vld [vmem:[%s8 + $0x4] sm:$0xf]
    %v369 = vld [vmem:[%s8 + $0x8] sm:$0xf]
    %v370 = vld [vmem:[%s8 + $0xc] sm:$0xf]
    %v371 = vld [vmem:[%s8 + $0x10] sm:$0xf]
    %v372 = vld [vmem:[%s8 + $0x14] sm:$0xf]
    %v373 = vld [vmem:[%s8 + $0x18] sm:$0xf]
    %v374 = vld [vmem:[%s8 + $0x1c] sm:$0xf]
    %v375 = vld [vmem:[%s8 + $0x20] sm:$0xf]
    %v376 = vld [vmem:[%s8 + $0x24] sm:$0xf]
    %v377 = vld [vmem:[%s8 + $0x28] sm:$0xf]
    %v378 = vld [vmem:[%s8 + $0x2c] sm:$0xf]
    %v379 = vld [vmem:[%s8 + $0x30] sm:$0xf]
    %v380 = vld [vmem:[%s8 + $0x34] sm:$0xf]
    %v381 = vld [vmem:[%s8 + $0x38] sm:$0xf]
    %v382 = vld [vmem:[%s8 + $0x3c] sm:$0xf]
    %v383 = vld [vmem:[%s9] sm:$0x1]
    %v385 = vlaneseq
    %v386 = vshrl.u32 %v385, 7
    %v387 = vsub.s32 0, %v386
    %v388 = vrot.slane %v383, %v387
    %v406 = vunpack.c.l.b16 %v367
    %v407 = vunpack.c.l.b16 %v368
    %v408 = vunpack.c.l.b16 %v369
    %v409 = vunpack.c.l.b16 %v370
    %v410 = vunpack.c.l.b16 %v371
    %v411 = vunpack.c.l.b16 %v372
    %v412 = vunpack.c.l.b16 %v373
    %v413 = vunpack.c.l.b16 %v374
    %v414 = vunpack.c.l.b16 %v375
    %v415 = vunpack.c.l.b16 %v376
    %v416 = vunpack.c.l.b16 %v377
    %v417 = vunpack.c.l.b16 %v378
    %v418 = vunpack.c.l.b16 %v379
    %v419 = vunpack.c.l.b16 %v380
    %v420 = vunpack.c.l.b16 %v381
    %v421 = vunpack.c.l.b16 %v382
    %v422 = vpack.c.b16 %v407, %v406
    %v423 = vpack.c.b16 %v409, %v408
    %v424 = vpack.c.b16 %v411, %v410
    %v425 = vpack.c.b16 %v413, %v412
    %v426 = vpack.c.b16 %v415, %v414
    %v427 = vpack.c.b16 %v417, %v416
    %v428 = vpack.c.b16 %v419, %v418
    %v429 = vpack.c.b16 %v421, %v420
    %438 = vmatprep.subr.bf16.mxu0 0
    %439 = vmatpush1.bf16.msra.mxu0 %v429
    %440 = vmatprep.subr.bf16.mxu0 0
    %441 = vmatpush1.bf16.msra.mxu0 %v428
    %442 = vmatprep.subr.bf16.mxu0 0
    %443 = vmatpush1.bf16.msra.mxu0 %v427
    %444 = vmatprep.subr.bf16.mxu0 0
    %445 = vmatpush1.bf16.msra.mxu0 %v426
    %446 = vmatprep.subr.bf16.mxu0 0
    %447 = vmatpush1.bf16.msra.mxu0 %v425
    %448 = vmatprep.subr.bf16.mxu0 0
    %449 = vmatpush1.bf16.msra.mxu0 %v424
    %450 = vmatprep.subr.bf16.mxu0 0
    %451 = vmatpush1.bf16.msra.mxu0 %v423
    %452 = vmatprep.subr.bf16.mxu0 0
    %453 = vmatpush1.bf16.msra.mxu0 %v422
    %454 = vmatprep.subr.bf16.mxu0 0
    %455 = vmatpush2.bf16.msra.mxu0 0
    %456 = vmatprep.subr.bf16.mxu0 0
    %457 = vmatpush2.bf16.msra.mxu0 0
    %458 = vmatprep.subr.bf16.mxu0 0
    %459 = vmatpush2.bf16.msra.mxu0 0
    %460 = vmatprep.subr.bf16.mxu0 0
    %461 = vmatpush2.bf16.msra.mxu0 0
    %462 = vmatprep.subr.bf16.mxu0 0
    %463 = vmatpush2.bf16.msra.mxu0 0
    %464 = vmatprep.subr.bf16.mxu0 0
    %465 = vmatpush2.bf16.msra.mxu0 0
    %466 = vmatprep.subr.bf16.mxu0 0
    %467 = vmatpush2.bf16.msra.mxu0 0
    %468 = vmatprep.subr.bf16.mxu0 0
    %469 = vmatpush2.bf16.msra.mxu0 0
    %470 = vmatprep.mubr.bf16.mxu0 0
    %471 = vmatmul.mubr.bf16.gmra.mxu0 %v366
    %v472 = vpop.f32.mrf.mxu0
    %v473 = vadd.f32 %v388, %v472
    %v474 = vpop.f32.mrf.mxu0
    %v475 = vpop.f32.mrf.mxu0
    %v476 = vadd.f32 %v388, %v475
    %v477 = vpop.f32.mrf.mxu0
    %478 = vdwg.mxu0
    %v479 = vmul.f32 %v53, %v53
    %v480 = vmul.f32 %v54, %v54
    %v481 = vld [vmem:[%s10] sm:$0xff]
    %v482 = vld [vmem:[%s10 + $0x8] sm:$0xff]
    %v483 = vld [vmem:[%s10 + $0x10] sm:$0xf]
    %v485 = vsel %vm77, %v479, 0
    %v488 = vsel %vm77, %v480, 0
    %vm490 = vcmask 1043456
    %v492 = vsel %vm490, %v483, 0
    %494 = vmatprep.subr.mxu0 0.0
    %495 = vmatpush1.msra.mxu0 0.0
    %496 = vmatprep.subr.mxu0 0.0
    %497 = vmatpush1.msra.mxu0 0.0
    %498 = vmatprep.subr.mxu0 0.0
    %499 = vmatpush1.msra.mxu0 0.0
    %500 = vmatprep.subr.mxu0 0.0
    %501 = vmatpush1.msra.mxu0 0.0
    %502 = vmatprep.subr.mxu0 0.0
    %503 = vmatpush1.msra.mxu0 0.0
    %504 = vmatprep.subr.mxu0 0.0
    %505 = vmatpush1.msra.mxu0 0.0
    %506 = vmatprep.subr.mxu0 0.0
    %507 = vmatpush1.msra.mxu0 0.0
    %508 = vmatprep.subr.mxu0 0.0
    %509 = vmatpush1.msra.mxu0 0.0
    %510 = vmatprep.subr.mxu0 0.0
    %511 = vmatpush1.msra.mxu0 0.0
    %512 = vmatprep.subr.mxu0 0.0
    %513 = vmatpush1.msra.mxu0 0.0
    %514 = vmatprep.subr.mxu0 0.0
    %515 = vmatpush1.msra.mxu0 0.0
    %516 = vmatprep.subr.mxu0 0.0
    %517 = vmatpush1.msra.mxu0 0.0
    %518 = vmatprep.subr.mxu0 0.0
    %519 = vmatpush1.msra.mxu0 0.0
    %520 = vmatprep.subr.mxu0 0.0
    %521 = vmatpush1.msra.mxu0 %v492
    %522 = vmatprep.subr.mxu0 0.0
    %523 = vmatpush1.msra.mxu0 %v482
    %524 = vmatprep.subr.mxu0 0.0
    %525 = vmatpush1.msra.mxu0 %v481
    %526 = vmatprep.subr.mxu0 0.0
    %527 = vmatpush2.msra.mxu0 0.0
    %528 = vmatprep.subr.mxu0 0.0
    %529 = vmatpush2.msra.mxu0 0.0
    %530 = vmatprep.subr.mxu0 0.0
    %531 = vmatpush2.msra.mxu0 0.0
    %532 = vmatprep.subr.mxu0 0.0
    %533 = vmatpush2.msra.mxu0 0.0
    %534 = vmatprep.subr.mxu0 0.0
    %535 = vmatpush2.msra.mxu0 0.0
    %536 = vmatprep.subr.mxu0 0.0
    %537 = vmatpush2.msra.mxu0 0.0
    %538 = vmatprep.subr.mxu0 0.0
    %539 = vmatpush2.msra.mxu0 0.0
    %540 = vmatprep.subr.mxu0 0.0
    %541 = vmatpush2.msra.mxu0 0.0
    %542 = vmatprep.subr.mxu0 0.0
    %543 = vmatpush2.msra.mxu0 0.0
    %544 = vmatprep.subr.mxu0 0.0
    %545 = vmatpush2.msra.mxu0 0.0
    %546 = vmatprep.subr.mxu0 0.0
    %547 = vmatpush2.msra.mxu0 0.0
    %548 = vmatprep.subr.mxu0 0.0
    %549 = vmatpush2.msra.mxu0 0.0
    %550 = vmatprep.subr.mxu0 0.0
    %551 = vmatpush2.msra.mxu0 0.0
    %552 = vmatprep.subr.mxu0 0.0
    %553 = vmatpush2.msra.mxu0 0.0
    %554 = vmatprep.subr.mxu0 0.0
    %555 = vmatpush2.msra.mxu0 0.0
    %556 = vmatprep.subr.mxu0 0.0
    %557 = vmatpush2.msra.mxu0 0.0
    %558 = vmatprep.mubr.f32.mxu0 0.0
    %559 = vmatmul.mubr.f32.gmra.mxu0 %v485
    %v560 = vpop.f32.mrf.mxu0
    %v561 = vadd.f32 0.0, %v560
    %v562 = vpop.f32.mrf.mxu0
    %563 = vmatprep.mubr.f32.mxu0 0.0
    %564 = vmatmul.mubr.f32.gmra.mxu0 %v488
    %v565 = vpop.f32.mrf.mxu0
    %v566 = vadd.f32 0.0, %v565
    %v567 = vpop.f32.mrf.mxu0
    %568 = vdwg.mxu0
    %v569 = vmul.f32 %v561, 0.5
    %v570 = vmul.f32 %v566, 0.5
    %v571 = vsub.f32 %v569, %v473
    %v572 = vsub.f32 %v570, %v476
    %v573 = vmul.f32 %v55, %v571
    %v574 = vmul.f32 %v56, %v572
    %v575 = vadd.f32 %v473, %v573
    %v576 = vadd.f32 %v476, %v574
    %vm577 = vcmask 31744
    %578 = vst.msk [vmem:[%s11] sm:$0xff] %vm577, %v575
    %579 = vst.msk [vmem:[%s11 + $0x8] sm:$0xff] %vm577, %v576
    // Predicated region
    $region50: #{tpu_custom_call.1} parent=1 // pred_check
      _
    $region51: #{tpu_custom_call.1} parent=1 // pred_check_branch
      %581 = sbr.rel (0) target = $region53
    $region52: #{tpu_custom_call.1} parent=1 // pred_region
      _
    $region53: #{tpu_custom_call.1} parent=1 // pred_fallthru
      _
    // Predicated region
    $region54: #{tpu_custom_call.1} parent=1 // pred_check
      _
    $region55: #{tpu_custom_call.1} parent=1 // pred_check_branch
      %583 = sbr.rel (0) target = $region57
    $region56: #{tpu_custom_call.1} parent=1 // pred_region
      _
    $region57: #{tpu_custom_call.1} parent=1 // pred_fallthru
      _
    %584 = vsyncpa [#allocation3], 1

</llo_original>
